<compile_context>
chip_gen: v6e
topology: v6e:2x2x1
jax: 0.10.0
libtpu: 0.0.40
codegen_flags: <defaults>
</compile_context>

<pallas_src>
import jax
import jax.numpy as jnp
from jax.experimental import pallas as pl
from jax.experimental.pallas import tpu as pltpu

LN_EPS = 1e-5  # torch.nn.LayerNorm default


def _round_up(x, m):
    return ((x + m - 1) // m) * m


def _block_kernel(x_ref, g_ref, b_ref, out_ref):
    """Standard path (C on lanes): LayerNorm + identity mixer + residual add.

    gamma/beta are pre-scaled by 2 in the wrapper (folds `y + mixer(y)` = 2*y).
    """
    x = x_ref[...].astype(jnp.float32)                        # (tR, C)
    mean = jnp.mean(x, axis=-1, keepdims=True)
    xc = x - mean
    var = jnp.mean(xc * xc, axis=-1, keepdims=True)
    inv = jax.lax.rsqrt(var + LN_EPS)
    out = xc * inv * g_ref[...].astype(jnp.float32) + b_ref[...].astype(jnp.float32)
    out_ref[...] = out.astype(out_ref.dtype)


def _block_kernel_packed(x_ref, seg_ref, g_ref, b_ref, out_ref):
    """Lane-packed path for C < 128: G=128/C rows packed into one 128-lane slab.

    Per-segment (per original row) mean and E[(x-mean)^2] are segmented sums
    computed on the (otherwise idle) MXU with a block-diagonal matrix whose
    entries are 0 or 1/C (exact in bf16).  To keep f32 accuracy with
    single-pass bf16 MXU dots, the f32 activations are split into bf16 hi/lo
    halves and the two partial dots are summed (exact-hi + ~2^-17 relative lo).
    gamma/beta are pre-scaled by 2 and tiled G times in the wrapper.
    """
    x = x_ref[...].astype(jnp.float32)                        # (tR, 128)
    seg = seg_ref[...]                                        # (128, 128), {0, 1/C}

    x_hi = x.astype(jnp.bfloat16).astype(jnp.float32)
    x_lo = x - x_hi
    mean = (jnp.dot(x_hi, seg, preferred_element_type=jnp.float32)
            + jnp.dot(x_lo, seg, preferred_element_type=jnp.float32))

    xc = x - mean
    sq = xc * xc
    sq_hi = sq.astype(jnp.bfloat16).astype(jnp.float32)
    sq_lo = sq - sq_hi
    var = (jnp.dot(sq_hi, seg, preferred_element_type=jnp.float32)
           + jnp.dot(sq_lo, seg, preferred_element_type=jnp.float32))

    inv = jax.lax.rsqrt(var + LN_EPS)
    out = xc * inv * g_ref[...].astype(jnp.float32) + b_ref[...].astype(jnp.float32)
    out_ref[...] = out.astype(out_ref.dtype)


def block_forward(hidden_states, gamma, beta, residual=None, *,
                  max_row_tile=8192,
                  vmem_budget_bytes=16 << 20,
                  vmem_limit_bytes=32 << 20):
    """JAX wrapper reproducing Block.forward(hidden_states, residual) with default flags."""
    N, L, C = hidden_states.shape
    rows = N * L
    dtype = hidden_states.dtype
    itemsize = jnp.dtype(dtype).itemsize
    sublane = {4: 8, 2: 16, 1: 32}.get(itemsize, 8)

    # Fold `y + mixer(y)` (mixer = Identity, DropPath p=0) into the affine params.
    g2 = 2.0 * gamma.astype(jnp.float32)
    b2 = 2.0 * beta.astype(jnp.float32)

    x2d = hidden_states.reshape(rows, C)          # contiguous reshape: no copy

    # Lane packing only when the zero-copy reshape is possible.
    use_packed = (C < 128) and (128 % C == 0) and (rows % (128 // C) == 0)
    G = (128 // C) if use_packed else 1
    Cp = G * C
    packed_rows = rows // G

    # Tile sizing: 2x2 double-buffered dtype blocks + ~6 f32 temporary rows.
    per_row_bytes = 4 * Cp * itemsize + 6 * Cp * 4
    budget_rows = max(sublane, vmem_budget_bytes // per_row_bytes)
    # Keep >= 2 grid steps where possible so v7x's two TensorCores both stream.
    half_rows = _round_up(pl.cdiv(packed_rows, 2), sublane)
    row_tile = int(min(max_row_tile, budget_rows, half_rows))
    row_tile = max(sublane, (row_tile // sublane) * sublane)
    grid = (pl.cdiv(packed_rows, row_tile),)      # ragged last block is masked by Pallas

    cparams = pltpu.CompilerParams(
        dimension_semantics=("parallel",),
        vmem_limit_bytes=vmem_limit_bytes,
    )

    if use_packed:
        xp = x2d.reshape(packed_rows, Cp)                              # free reshape
        gp = jnp.tile(g2, (G,)).reshape(1, Cp)
        bp = jnp.tile(b2, (G,)).reshape(1, Cp)
        lane = jnp.arange(Cp)
        # Block-diagonal segment-mean matrix with 1/C folded in (exact: C is a power of 2).
        seg = ((lane[:, None] // C) == (lane[None, :] // C)).astype(jnp.float32) * (1.0 / C)

        out_p = pl.pallas_call(
            _block_kernel_packed,
            out_shape=jax.ShapeDtypeStruct((packed_rows, Cp), dtype),
            grid=grid,
            in_specs=[
                pl.BlockSpec((row_tile, Cp), lambda i: (i, 0)),   # packed hidden rows
                pl.BlockSpec((Cp, Cp), lambda i: (0, 0)),         # segment-mean matrix
                pl.BlockSpec((1, Cp), lambda i: (0, 0)),          # 2*gamma (tiled)
                pl.BlockSpec((1, Cp), lambda i: (0, 0)),          # 2*beta  (tiled)
            ],
            out_specs=pl.BlockSpec((row_tile, Cp), lambda i: (i, 0)),
            compiler_params=cparams,
        )(xp, seg, gp, bp)
        out = out_p.reshape(N, L, C)                                   # free reshape
    else:
        # TODO(synk): for C >= 128 with C % 128 != 0 this path issues partially
        # masked lane stores; padding channels would cost an extra full HBM pass,
        # so it is deliberately not done here.
        out2d = pl.pallas_call(
            _block_kernel,
            out_shape=jax.ShapeDtypeStruct((rows, C), dtype),
            grid=grid,
            in_specs=[
                pl.BlockSpec((row_tile, C), lambda i: (i, 0)),    # hidden row tile
                pl.BlockSpec((1, C), lambda i: (0, 0)),           # 2*gamma
                pl.BlockSpec((1, C), lambda i: (0, 0)),           # 2*beta
            ],
            out_specs=pl.BlockSpec((row_tile, C), lambda i: (i, 0)),
            compiler_params=cparams,
        )(x2d, g2.reshape(1, C), b2.reshape(1, C))
        out = out2d.reshape(N, L, C)

    # residual is untouched by the non-fused path (only returned).
    return out, residual


def _reference_forward(hidden_states, gamma, beta, residual=None):
    """Pure-JAX reference of the same forward (for correctness check)."""
    x = hidden_states.astype(jnp.float32)
    mean = jnp.mean(x, axis=-1, keepdims=True)
    var = jnp.mean((x - mean) ** 2, axis=-1, keepdims=True)
    y = (x - mean) * jax.lax.rsqrt(var + LN_EPS) * gamma + beta
    out = y + y
    return out.astype(hidden_states.dtype), residual


# TODO(synk): fused_add_norm=True path (Triton layer_norm_fn / rms_norm_fn), DropPath/Dropout
# with nonzero prob, PatchMerging downsample, SwiGLUFFNFused and split_head branches are not
# taken with the default flags and are not implemented here.

if __name__ == "__main__":
    key = jax.random.PRNGKey(0)
    keys = jax.random.split(key, 12)

    def _check(name, N, L, C, kx, kg, kb, atol=1e-4, rtol=1e-4):
        hs = jax.random.normal(kx, (N, L, C), dtype=jnp.float32)
        g = 1.0 + 0.1 * jax.random.normal(kg, (C,), dtype=jnp.float32)
        b = 0.1 * jax.random.normal(kb, (C,), dtype=jnp.float32)
        out, res = block_forward(hs, g, b, residual=None)
        out = jax.block_until_ready(out)
        ref, _ = _reference_forward(hs, g, b)
        assert out.shape == (N, L, C)
        assert res is None
        assert jnp.allclose(out, ref, atol=atol, rtol=rtol), f"mismatch vs reference ({name})"

    # 1) Packed path, aligned: batch=2, seq=16 (h=w=4), dim=32 (C=32 -> G=4).
    _check("packed aligned", 2, 16, 32, keys[0], keys[1], keys[2])

    # 2) Packed path with a ragged last row-block and a 2-step grid
    #    (rows=40 -> packed_rows=10, row_tile=8): exercises boundary masking.
    _check("packed ragged", 2, 20, 32, keys[3], keys[4], keys[5])

    # 3) Standard path (C = 128) with a row count not divisible by the tile.
    _check("standard ragged", 2, 9, 128, keys[6], keys[7], keys[8])

    # 4) Fallback: C=32 but rows % G != 0 -> standard lane-masked path.
    _check("packed fallback", 3, 3, 32, keys[9], keys[10], keys[11])

    print("KERNEL_OK")
</pallas_src>

<mosaic_0001>
module attributes {stable_mosaic.version = 11 : i64} {
  func.func @_block_kernel_packed(%arg0: i32, %arg1: memref<8x128xf32, #tpu.memory_space<vmem>>, %arg2: memref<128x128xf32, #tpu.memory_space<vmem>>, %arg3: memref<1x128xf32, #tpu.memory_space<vmem>>, %arg4: memref<1x128xf32, #tpu.memory_space<vmem>>, %arg5: memref<8x128xf32, #tpu.memory_space<vmem>>) attributes {dimension_semantics = [#tpu.dimension_semantics<parallel>], iteration_bounds = array<i64: 1>, scalar_prefetch = 0 : i64, scratch_operands = 0 : i64, tpu.core_type = #tpu.core_type<tc>, window_params = [{transform_indices = @transform_0, window_bounds = array<i64: 8, 128>}, {pipeline_mode = #tpu.pipeline_mode<synchronous>, transform_indices = @transform_1, window_bounds = array<i64: 128, 128>}, {pipeline_mode = #tpu.pipeline_mode<synchronous>, transform_indices = @transform_2, window_bounds = array<i64: 1, 128>}, {pipeline_mode = #tpu.pipeline_mode<synchronous>, transform_indices = @transform_3, window_bounds = array<i64: 1, 128>}, {transform_indices = @transform_4, window_bounds = array<i64: 8, 128>}]} {
    %c0 = arith.constant 0 : index
    %c0_0 = arith.constant 0 : index
    %0 = vector.load %arg1[%c0, %c0_0] : memref<8x128xf32, #tpu.memory_space<vmem>>, vector<8x128xf32>
    %c0_1 = arith.constant 0 : index
    %c0_2 = arith.constant 0 : index
    %1 = vector.load %arg2[%c0_1, %c0_2] : memref<128x128xf32, #tpu.memory_space<vmem>>, vector<128x128xf32>
    %2 = arith.truncf %0 : vector<8x128xf32> to vector<8x128xbf16>
    %3 = arith.extf %2 : vector<8x128xbf16> to vector<8x128xf32>
    %4 = arith.subf %0, %3 : vector<8x128xf32>
    %cst = arith.constant dense<0.000000e+00> : vector<8x128xf32>
    %5 = tpu.matmul %3, %1, %cst {dimension_numbers = #tpu.dot_dimension_numbers<[1], [0], [0], [1], [0, 0, 1, 1], [], []>} : vector<8x128xf32>, vector<128x128xf32>, vector<8x128xf32> -> vector<8x128xf32>
    %cst_3 = arith.constant dense<0.000000e+00> : vector<8x128xf32>
    %6 = tpu.matmul %4, %1, %cst_3 {dimension_numbers = #tpu.dot_dimension_numbers<[1], [0], [0], [1], [0, 0, 1, 1], [], []>} : vector<8x128xf32>, vector<128x128xf32>, vector<8x128xf32> -> vector<8x128xf32>
    %7 = arith.addf %5, %6 : vector<8x128xf32>
    %8 = arith.subf %0, %7 : vector<8x128xf32>
    %9 = arith.mulf %8, %8 : vector<8x128xf32>
    %10 = arith.truncf %9 : vector<8x128xf32> to vector<8x128xbf16>
    %11 = arith.extf %10 : vector<8x128xbf16> to vector<8x128xf32>
    %12 = arith.subf %9, %11 : vector<8x128xf32>
    %cst_4 = arith.constant dense<0.000000e+00> : vector<8x128xf32>
    %13 = tpu.matmul %11, %1, %cst_4 {dimension_numbers = #tpu.dot_dimension_numbers<[1], [0], [0], [1], [0, 0, 1, 1], [], []>} : vector<8x128xf32>, vector<128x128xf32>, vector<8x128xf32> -> vector<8x128xf32>
    %cst_5 = arith.constant dense<0.000000e+00> : vector<8x128xf32>
    %14 = tpu.matmul %12, %1, %cst_5 {dimension_numbers = #tpu.dot_dimension_numbers<[1], [0], [0], [1], [0, 0, 1, 1], [], []>} : vector<8x128xf32>, vector<128x128xf32>, vector<8x128xf32> -> vector<8x128xf32>
    %15 = arith.addf %13, %14 : vector<8x128xf32>
    %cst_6 = arith.constant 9.99999974E-6 : f32
    %16 = vector.broadcast %cst_6 : f32 to vector<8x128xf32>
    %17 = arith.addf %15, %16 : vector<8x128xf32>
    %18 = math.rsqrt %17 : vector<8x128xf32>
    %19 = arith.mulf %8, %18 : vector<8x128xf32>
    %c0_7 = arith.constant 0 : index
    %c0_8 = arith.constant 0 : index
    %20 = vector.load %arg3[%c0_7, %c0_8] : memref<1x128xf32, #tpu.memory_space<vmem>>, vector<1x128xf32>
    %21 = vector.broadcast %20 : vector<1x128xf32> to vector<8x128xf32>
    %22 = arith.mulf %19, %21 : vector<8x128xf32>
    %c0_9 = arith.constant 0 : index
    %c0_10 = arith.constant 0 : index
    %23 = vector.load %arg4[%c0_9, %c0_10] : memref<1x128xf32, #tpu.memory_space<vmem>>, vector<1x128xf32>
    %24 = vector.broadcast %23 : vector<1x128xf32> to vector<8x128xf32>
    %25 = arith.addf %22, %24 : vector<8x128xf32>
    %c0_11 = arith.constant 0 : index
    %c0_12 = arith.constant 0 : index
    %26 = vector.load %arg5[%c0_11, %c0_12] : memref<8x128xf32, #tpu.memory_space<vmem>>, vector<8x128xf32>
    tpu.vector_store %arg5[%c0_11, %c0_12], %25 {strides = array<i32>} : memref<8x128xf32, #tpu.memory_space<vmem>>, vector<8x128xf32>,
    return
  }
  func.func @transform_0(%arg0: i32) -> (i32, i32) {
    %c0_i32 = arith.constant 0 : i32
    %c0_i32_0 = arith.constant 0 : i32
    return %arg0, %c0_i32 : i32, i32
  }
  func.func @transform_1(%arg0: i32) -> (i32, i32) {
    %c0_i32 = arith.constant 0 : i32
    %c0_i32_0 = arith.constant 0 : i32
    %c0_i32_1 = arith.constant 0 : i32
    return %c0_i32, %c0_i32_0 : i32, i32
  }
  func.func @transform_2(%arg0: i32) -> (i32, i32) {
    %c0_i32 = arith.constant 0 : i32
    %c0_i32_0 = arith.constant 0 : i32
    %c0_i32_1 = arith.constant 0 : i32
    return %c0_i32, %c0_i32_0 : i32, i32
  }
  func.func @transform_3(%arg0: i32) -> (i32, i32) {
    %c0_i32 = arith.constant 0 : i32
    %c0_i32_0 = arith.constant 0 : i32
    %c0_i32_1 = arith.constant 0 : i32
    return %c0_i32, %c0_i32_0 : i32, i32
  }
  func.func @transform_4(%arg0: i32) -> (i32, i32) {
    %c0_i32 = arith.constant 0 : i32
    %c0_i32_0 = arith.constant 0 : i32
    return %arg0, %c0_i32 : i32, i32
  }
}

</mosaic_0001>

<llo_original>
// kernel: tpu_custom_call.1
$region0: #{tpu_custom_call.1}
  #allocation0 [shape = 'u32[]', space=smem, size = 0x4, offset = 0x4, fixed_abs, tag = 'smem constant byte address 0x4 - core index']
  #allocation1 [shape = 'u32[144,128]{1,0:T(1,128)}', space=vmem, size = 0x12000, scoped, tag = 'internal scratch']
  %s0 = inlined_call_operand.hbm [shape: f32[8,128], index: 0, kind: input, shape index: {}]
  %s1 = inlined_call_operand.hbm [shape: f32[128,128], index: 1, kind: input, shape index: {}]
  %s2 = inlined_call_operand.vmem [shape: f32[1,128], index: 2, kind: input, shape index: {}]
  %s3 = inlined_call_operand.vmem [shape: f32[1,128], index: 3, kind: input, shape index: {}]
  %s4 = inlined_call_operand.hbm [shape: f32[8,128], index: 4, kind: output, shape index: {}]
  %s5 = sld [smem:[#allocation0]]
  $region34: #{tpu_custom_call.1} parent=0
    _
  %s7 = ssub.s32 1, %s5
  %s8 = scalar_select 0, %s7, %s5
  $region1: #{tpu_custom_call.1} parent=0
    #allocation2 [shape = 'u8[4096]{0}', space=vmem, size = 0x1000, scoped, tag = 'input window, operand 0, single buffered']
    #allocation3 [shape = 's32[1]{0}', space=sflag, size = 0x4, scoped, tag = 'scoped memory for tpu_custom_call.1']
    #allocation4 [shape = 's32[1]{0}', space=sflag, size = 0x4, scoped, tag = 'scoped memory for tpu_custom_call.1']
    #allocation5 [shape = 'u8[65536]{0}', space=vmem, size = 0x10000, scoped, tag = 'input window, operand 1, single buffered']
    #allocation6 [shape = 's32[1]{0}', space=sflag, size = 0x4, scoped, tag = 'scoped memory for tpu_custom_call.1']
    #allocation7 [shape = 'u8[4096]{0}', space=vmem, size = 0x1000, scoped, tag = 'output window, operand 0, single buffered']
    %9 = vsyncpa [#allocation3], 0
    %10 = vsyncpa [#allocation6], 0
    %11 = vsyncpa [#allocation4], 0
    // Predicated region
    $region2: #{tpu_custom_call.1} parent=1 // pred_check
      _
    $region3: #{tpu_custom_call.1} parent=1 // pred_check_branch
      %13 = sbr.rel (0) target = $region5
    $region4: #{tpu_custom_call.1} parent=1 // pred_region
      %s15 = ssub.s32 128, 128
      %16 = vsyncadd [#allocation3], %s15
      %s18 = sshll.u32 [#allocation2], 4
      %s19 = int_to_ptr.vmem [resolvable:$true] %s18
      %21 = dma.hbm_to_vmem [thread:$0]  %s0, 128, %s19, [#allocation3]
    $region5: #{tpu_custom_call.1} parent=1 // pred_fallthru
      _
    // Predicated region
    $region6: #{tpu_custom_call.1} parent=1 // pred_check
      _
    $region7: #{tpu_custom_call.1} parent=1 // pred_check_branch
      %23 = sbr.rel (0) target = $region9
    $region8: #{tpu_custom_call.1} parent=1 // pred_region
      %s25 = ssub.s32 2048, 2048
      %26 = vsyncadd [#allocation6], %s25
      %s27 = sshll.u32 [#allocation5], 4
      %s28 = int_to_ptr.vmem [resolvable:$true] %s27
      %33 = dma.hbm_to_vmem [thread:$0]  %s1, 2048, %s28, [#allocation6], 128, 128, 8
    $region9: #{tpu_custom_call.1} parent=1 // pred_fallthru
      _
    // Predicated region
    $region10: #{tpu_custom_call.1} parent=1 // pred_check
      _
    $region11: #{tpu_custom_call.1} parent=1 // pred_check_branch
      %35 = sbr.rel (0) target = $region13
    $region12: #{tpu_custom_call.1} parent=1 // pred_region
      _
    $region13: #{tpu_custom_call.1} parent=1 // pred_fallthru
      _
    // Predicated region
    $region14: #{tpu_custom_call.1} parent=1 // pred_check
      _
    $region15: #{tpu_custom_call.1} parent=1 // pred_check_branch
      %37 = sbr.rel (0) target = $region17
    $region16: #{tpu_custom_call.1} parent=1 // pred_region
      _
    $region17: #{tpu_custom_call.1} parent=1 // pred_fallthru
      _
    // Predicated region
    $region18: #{tpu_custom_call.1} parent=1 // pred_check
      _
    $region19: #{tpu_custom_call.1} parent=1 // pred_check_branch
      %39 = sbr.rel (0) target = $region21
    $region20: #{tpu_custom_call.1} parent=1 // pred_region
      %40 = dma.done [#allocation3], 128
    $region21: #{tpu_custom_call.1} parent=1 // pred_fallthru
      _
    // Predicated region
    $region22: #{tpu_custom_call.1} parent=1 // pred_check
      _
    $region23: #{tpu_custom_call.1} parent=1 // pred_check_branch
      %42 = sbr.rel (0) target = $region25
    $region24: #{tpu_custom_call.1} parent=1 // pred_region
      %43 = dma.done [#allocation6], 2048
    $region25: #{tpu_custom_call.1} parent=1 // pred_fallthru
      _
    %v44 = vld [vmem:[#allocation2] sm:$0xff]
    %v45 = vld [vmem:[#allocation5] sm:$0xff]
    %v46 = vld [vmem:[#allocation5 + $0x8] sm:$0xff]
    %v47 = vld [vmem:[#allocation5 + $0x10] sm:$0xff]
    %v48 = vld [vmem:[#allocation5 + $0x18] sm:$0xff]
    %v49 = vld [vmem:[#allocation5 + $0x20] sm:$0xff]
    %v50 = vld [vmem:[#allocation5 + $0x28] sm:$0xff]
    %v51 = vld [vmem:[#allocation5 + $0x30] sm:$0xff]
    %v52 = vld [vmem:[#allocation5 + $0x38] sm:$0xff]
    %v53 = vld [vmem:[#allocation5 + $0x40] sm:$0xff]
    %v54 = vld [vmem:[#allocation5 + $0x48] sm:$0xff]
    %v55 = vld [vmem:[#allocation5 + $0x50] sm:$0xff]
    %v56 = vld [vmem:[#allocation5 + $0x58] sm:$0xff]
    %v57 = vld [vmem:[#allocation5 + $0x60] sm:$0xff]
    %v58 = vld [vmem:[#allocation5 + $0x68] sm:$0xff]
    %v59 = vld [vmem:[#allocation5 + $0x70] sm:$0xff]
    %v60 = vld [vmem:[#allocation5 + $0x78] sm:$0xff]
    %v61 = vpack.c.bf16 %v44, %v44
    %v62 = vunpack.c.l.bf16 %v61
    %v63 = vsub.f32 %v44, %v62
    %64 = vmatprep.subr.mxu0 0.0
    %65 = vmatpush1.msra.mxu0 %v60
    %66 = vmatprep.subr.mxu0 0.0
    %67 = vmatpush1.msra.mxu0 %v59
    %68 = vmatprep.subr.mxu0 0.0
    %69 = vmatpush1.msra.mxu0 %v58
    %70 = vmatprep.subr.mxu0 0.0
    %71 = vmatpush1.msra.mxu0 %v57
    %72 = vmatprep.subr.mxu0 0.0
    %73 = vmatpush1.msra.mxu0 %v56
    %74 = vmatprep.subr.mxu0 0.0
    %75 = vmatpush1.msra.mxu0 %v55
    %76 = vmatprep.subr.mxu0 0.0
    %77 = vmatpush1.msra.mxu0 %v54
    %78 = vmatprep.subr.mxu0 0.0
    %79 = vmatpush1.msra.mxu0 %v53
    %80 = vmatprep.subr.mxu0 0.0
    %81 = vmatpush1.msra.mxu0 %v52
    %82 = vmatprep.subr.mxu0 0.0
    %83 = vmatpush1.msra.mxu0 %v51
    %84 = vmatprep.subr.mxu0 0.0
    %85 = vmatpush1.msra.mxu0 %v50
    %86 = vmatprep.subr.mxu0 0.0
    %87 = vmatpush1.msra.mxu0 %v49
    %88 = vmatprep.subr.mxu0 0.0
    %89 = vmatpush1.msra.mxu0 %v48
    %90 = vmatprep.subr.mxu0 0.0
    %91 = vmatpush1.msra.mxu0 %v47
    %92 = vmatprep.subr.mxu0 0.0
    %93 = vmatpush1.msra.mxu0 %v46
    %94 = vmatprep.subr.mxu0 0.0
    %95 = vmatpush1.msra.mxu0 %v45
    %96 = vmatprep.subr.mxu0 0.0
    %97 = vmatpush2.msra.mxu0 0.0
    %98 = vmatprep.subr.mxu0 0.0
    %99 = vmatpush2.msra.mxu0 0.0
    %100 = vmatprep.subr.mxu0 0.0
    %101 = vmatpush2.msra.mxu0 0.0
    %102 = vmatprep.subr.mxu0 0.0
    %103 = vmatpush2.msra.mxu0 0.0
    %104 = vmatprep.subr.mxu0 0.0
    %105 = vmatpush2.msra.mxu0 0.0
    %106 = vmatprep.subr.mxu0 0.0
    %107 = vmatpush2.msra.mxu0 0.0
    %108 = vmatprep.subr.mxu0 0.0
    %109 = vmatpush2.msra.mxu0 0.0
    %110 = vmatprep.subr.mxu0 0.0
    %111 = vmatpush2.msra.mxu0 0.0
    %112 = vmatprep.subr.mxu0 0.0
    %113 = vmatpush2.msra.mxu0 0.0
    %114 = vmatprep.subr.mxu0 0.0
    %115 = vmatpush2.msra.mxu0 0.0
    %116 = vmatprep.subr.mxu0 0.0
    %117 = vmatpush2.msra.mxu0 0.0
    %118 = vmatprep.subr.mxu0 0.0
    %119 = vmatpush2.msra.mxu0 0.0
    %120 = vmatprep.subr.mxu0 0.0
    %121 = vmatpush2.msra.mxu0 0.0
    %122 = vmatprep.subr.mxu0 0.0
    %123 = vmatpush2.msra.mxu0 0.0
    %124 = vmatprep.subr.mxu0 0.0
    %125 = vmatpush2.msra.mxu0 0.0
    %126 = vmatprep.subr.mxu0 0.0
    %127 = vmatpush2.msra.mxu0 0.0
    %128 = vmatprep.mubr.f32.mxu0 0.0
    %129 = vmatmul.mubr.f32.gmra.mxu0 %v63
    %v130 = vpop.f32.mrf.mxu0
    %v131 = vadd.f32 0.0, %v130
    %v132 = vpop.f32.mrf.mxu0
    %133 = vdwg.mxu0
    %134 = vmatprep.subr.mxu0 0.0
    %135 = vmatpush1.msra.mxu0 %v60
    %136 = vmatprep.subr.mxu0 0.0
    %137 = vmatpush1.msra.mxu0 %v59
    %138 = vmatprep.subr.mxu0 0.0
    %139 = vmatpush1.msra.mxu0 %v58
    %140 = vmatprep.subr.mxu0 0.0
    %141 = vmatpush1.msra.mxu0 %v57
    %142 = vmatprep.subr.mxu0 0.0
    %143 = vmatpush1.msra.mxu0 %v56
    %144 = vmatprep.subr.mxu0 0.0
    %145 = vmatpush1.msra.mxu0 %v55
    %146 = vmatprep.subr.mxu0 0.0
    %147 = vmatpush1.msra.mxu0 %v54
    %148 = vmatprep.subr.mxu0 0.0
    %149 = vmatpush1.msra.mxu0 %v53
    %150 = vmatprep.subr.mxu0 0.0
    %151 = vmatpush1.msra.mxu0 %v52
    %152 = vmatprep.subr.mxu0 0.0
    %153 = vmatpush1.msra.mxu0 %v51
    %154 = vmatprep.subr.mxu0 0.0
    %155 = vmatpush1.msra.mxu0 %v50
    %156 = vmatprep.subr.mxu0 0.0
    %157 = vmatpush1.msra.mxu0 %v49
    %158 = vmatprep.subr.mxu0 0.0
    %159 = vmatpush1.msra.mxu0 %v48
    %160 = vmatprep.subr.mxu0 0.0
    %161 = vmatpush1.msra.mxu0 %v47
    %162 = vmatprep.subr.mxu0 0.0
    %163 = vmatpush1.msra.mxu0 %v46
    %164 = vmatprep.subr.mxu0 0.0
    %165 = vmatpush1.msra.mxu0 %v45
    %166 = vmatprep.subr.mxu0 0.0
    %167 = vmatpush2.msra.mxu0 0.0
    %168 = vmatprep.subr.mxu0 0.0
    %169 = vmatpush2.msra.mxu0 0.0
    %170 = vmatprep.subr.mxu0 0.0
    %171 = vmatpush2.msra.mxu0 0.0
    %172 = vmatprep.subr.mxu0 0.0
    %173 = vmatpush2.msra.mxu0 0.0
    %174 = vmatprep.subr.mxu0 0.0
    %175 = vmatpush2.msra.mxu0 0.0
    %176 = vmatprep.subr.mxu0 0.0
    %177 = vmatpush2.msra.mxu0 0.0
    %178 = vmatprep.subr.mxu0 0.0
    %179 = vmatpush2.msra.mxu0 0.0
    %180 = vmatprep.subr.mxu0 0.0
    %181 = vmatpush2.msra.mxu0 0.0
    %182 = vmatprep.subr.mxu0 0.0
    %183 = vmatpush2.msra.mxu0 0.0
    %184 = vmatprep.subr.mxu0 0.0
    %185 = vmatpush2.msra.mxu0 0.0
    %186 = vmatprep.subr.mxu0 0.0
    %187 = vmatpush2.msra.mxu0 0.0
    %188 = vmatprep.subr.mxu0 0.0
    %189 = vmatpush2.msra.mxu0 0.0
    %190 = vmatprep.subr.mxu0 0.0
    %191 = vmatpush2.msra.mxu0 0.0
    %192 = vmatprep.subr.mxu0 0.0
    %193 = vmatpush2.msra.mxu0 0.0
    %194 = vmatprep.subr.mxu0 0.0
    %195 = vmatpush2.msra.mxu0 0.0
    %196 = vmatprep.subr.mxu0 0.0
    %197 = vmatpush2.msra.mxu0 0.0
    %198 = vmatprep.mubr.f32.mxu0 0.0
    %199 = vmatmul.mubr.f32.gmra.mxu0 %v62
    %v200 = vpop.f32.mrf.mxu0
    %v201 = vadd.f32 %v131, %v200
    %v202 = vpop.f32.mrf.mxu0
    %203 = vdwg.mxu0
    %v204 = vsub.f32 %v44, %v201
    %v205 = vmul.f32 %v204, %v204
    %v206 = vpack.c.bf16 %v205, %v205
    %v207 = vunpack.c.l.bf16 %v206
    %v208 = vsub.f32 %v205, %v207
    %209 = vmatprep.subr.mxu0 0.0
    %210 = vmatpush1.msra.mxu0 %v60
    %211 = vmatprep.subr.mxu0 0.0
    %212 = vmatpush1.msra.mxu0 %v59
    %213 = vmatprep.subr.mxu0 0.0
    %214 = vmatpush1.msra.mxu0 %v58
    %215 = vmatprep.subr.mxu0 0.0
    %216 = vmatpush1.msra.mxu0 %v57
    %217 = vmatprep.subr.mxu0 0.0
    %218 = vmatpush1.msra.mxu0 %v56
    %219 = vmatprep.subr.mxu0 0.0
    %220 = vmatpush1.msra.mxu0 %v55
    %221 = vmatprep.subr.mxu0 0.0
    %222 = vmatpush1.msra.mxu0 %v54
    %223 = vmatprep.subr.mxu0 0.0
    %224 = vmatpush1.msra.mxu0 %v53
    %225 = vmatprep.subr.mxu0 0.0
    %226 = vmatpush1.msra.mxu0 %v52
    %227 = vmatprep.subr.mxu0 0.0
    %228 = vmatpush1.msra.mxu0 %v51
    %229 = vmatprep.subr.mxu0 0.0
    %230 = vmatpush1.msra.mxu0 %v50
    %231 = vmatprep.subr.mxu0 0.0
    %232 = vmatpush1.msra.mxu0 %v49
    %233 = vmatprep.subr.mxu0 0.0
    %234 = vmatpush1.msra.mxu0 %v48
    %235 = vmatprep.subr.mxu0 0.0
    %236 = vmatpush1.msra.mxu0 %v47
    %237 = vmatprep.subr.mxu0 0.0
    %238 = vmatpush1.msra.mxu0 %v46
    %239 = vmatprep.subr.mxu0 0.0
    %240 = vmatpush1.msra.mxu0 %v45
    %241 = vmatprep.subr.mxu0 0.0
    %242 = vmatpush2.msra.mxu0 0.0
    %243 = vmatprep.subr.mxu0 0.0
    %244 = vmatpush2.msra.mxu0 0.0
    %245 = vmatprep.subr.mxu0 0.0
    %246 = vmatpush2.msra.mxu0 0.0
    %247 = vmatprep.subr.mxu0 0.0
    %248 = vmatpush2.msra.mxu0 0.0
    %249 = vmatprep.subr.mxu0 0.0
    %250 = vmatpush2.msra.mxu0 0.0
    %251 = vmatprep.subr.mxu0 0.0
    %252 = vmatpush2.msra.mxu0 0.0
    %253 = vmatprep.subr.mxu0 0.0
    %254 = vmatpush2.msra.mxu0 0.0
    %255 = vmatprep.subr.mxu0 0.0
    %256 = vmatpush2.msra.mxu0 0.0
    %257 = vmatprep.subr.mxu0 0.0
    %258 = vmatpush2.msra.mxu0 0.0
    %259 = vmatprep.subr.mxu0 0.0
    %260 = vmatpush2.msra.mxu0 0.0
    %261 = vmatprep.subr.mxu0 0.0
    %262 = vmatpush2.msra.mxu0 0.0
    %263 = vmatprep.subr.mxu0 0.0
    %264 = vmatpush2.msra.mxu0 0.0
    %265 = vmatprep.subr.mxu0 0.0
    %266 = vmatpush2.msra.mxu0 0.0
    %267 = vmatprep.subr.mxu0 0.0
    %268 = vmatpush2.msra.mxu0 0.0
    %269 = vmatprep.subr.mxu0 0.0
    %270 = vmatpush2.msra.mxu0 0.0
    %271 = vmatprep.subr.mxu0 0.0
    %272 = vmatpush2.msra.mxu0 0.0
    %273 = vmatprep.mubr.f32.mxu0 0.0
    %274 = vmatmul.mubr.f32.gmra.mxu0 %v208
    %v275 = vpop.f32.mrf.mxu0
    %v276 = vadd.f32 0.0, %v275
    %v277 = vpop.f32.mrf.mxu0
    %278 = vdwg.mxu0
    %279 = vmatprep.subr.mxu0 0.0
    %280 = vmatpush1.msra.mxu0 %v60
    %281 = vmatprep.subr.mxu0 0.0
    %282 = vmatpush1.msra.mxu0 %v59
    %283 = vmatprep.subr.mxu0 0.0
    %284 = vmatpush1.msra.mxu0 %v58
    %285 = vmatprep.subr.mxu0 0.0
    %286 = vmatpush1.msra.mxu0 %v57
    %287 = vmatprep.subr.mxu0 0.0
    %288 = vmatpush1.msra.mxu0 %v56
    %289 = vmatprep.subr.mxu0 0.0
    %290 = vmatpush1.msra.mxu0 %v55
    %291 = vmatprep.subr.mxu0 0.0
    %292 = vmatpush1.msra.mxu0 %v54
    %293 = vmatprep.subr.mxu0 0.0
    %294 = vmatpush1.msra.mxu0 %v53
    %295 = vmatprep.subr.mxu0 0.0
    %296 = vmatpush1.msra.mxu0 %v52
    %297 = vmatprep.subr.mxu0 0.0
    %298 = vmatpush1.msra.mxu0 %v51
    %299 = vmatprep.subr.mxu0 0.0
    %300 = vmatpush1.msra.mxu0 %v50
    %301 = vmatprep.subr.mxu0 0.0
    %302 = vmatpush1.msra.mxu0 %v49
    %303 = vmatprep.subr.mxu0 0.0
    %304 = vmatpush1.msra.mxu0 %v48
    %305 = vmatprep.subr.mxu0 0.0
    %306 = vmatpush1.msra.mxu0 %v47
    %307 = vmatprep.subr.mxu0 0.0
    %308 = vmatpush1.msra.mxu0 %v46
    %309 = vmatprep.subr.mxu0 0.0
    %310 = vmatpush1.msra.mxu0 %v45
    %311 = vmatprep.subr.mxu0 0.0
    %312 = vmatpush2.msra.mxu0 0.0
    %313 = vmatprep.subr.mxu0 0.0
    %314 = vmatpush2.msra.mxu0 0.0
    %315 = vmatprep.subr.mxu0 0.0
    %316 = vmatpush2.msra.mxu0 0.0
    %317 = vmatprep.subr.mxu0 0.0
    %318 = vmatpush2.msra.mxu0 0.0
    %319 = vmatprep.subr.mxu0 0.0
    %320 = vmatpush2.msra.mxu0 0.0
    %321 = vmatprep.subr.mxu0 0.0
    %322 = vmatpush2.msra.mxu0 0.0
    %323 = vmatprep.subr.mxu0 0.0
    %324 = vmatpush2.msra.mxu0 0.0
    %325 = vmatprep.subr.mxu0 0.0
    %326 = vmatpush2.msra.mxu0 0.0
    %327 = vmatprep.subr.mxu0 0.0
    %328 = vmatpush2.msra.mxu0 0.0
    %329 = vmatprep.subr.mxu0 0.0
    %330 = vmatpush2.msra.mxu0 0.0
    %331 = vmatprep.subr.mxu0 0.0
    %332 = vmatpush2.msra.mxu0 0.0
    %333 = vmatprep.subr.mxu0 0.0
    %334 = vmatpush2.msra.mxu0 0.0
    %335 = vmatprep.subr.mxu0 0.0
    %336 = vmatpush2.msra.mxu0 0.0
    %337 = vmatprep.subr.mxu0 0.0
    %338 = vmatpush2.msra.mxu0 0.0
    %339 = vmatprep.subr.mxu0 0.0
    %340 = vmatpush2.msra.mxu0 0.0
    %341 = vmatprep.subr.mxu0 0.0
    %342 = vmatpush2.msra.mxu0 0.0
    %343 = vmatprep.mubr.f32.mxu0 0.0
    %344 = vmatmul.mubr.f32.gmra.mxu0 %v207
    %v345 = vpop.f32.mrf.mxu0
    %v346 = vadd.f32 %v276, %v345
    %v347 = vpop.f32.mrf.mxu0
    %348 = vdwg.mxu0
    %v349 = vadd.f32 %v346, 1e-05
    %v350 = vrsqrt.pop %v349
    %v351 = vmul.f32 %v204, %v350
    %v352 = vld [vmem:[%s2] sm:$0x1]
    %v354 = vlaneseq
    %v355 = vshrl.u32 %v354, 7
    %v356 = vsub.s32 0, %v355
    %v357 = vrot.slane %v352, %v356
    %v359 = vmul.f32 %v351, %v357
    %v360 = vld [vmem:[%s3] sm:$0x1]
    %v362 = vlaneseq
    %v363 = vshrl.u32 %v362, 7
    %v364 = vsub.s32 0, %v363
    %v365 = vrot.slane %v360, %v364
    %v367 = vadd.f32 %v359, %v365
    %368 = vst [vmem:[#allocation7] sm:$0xff] %v367
    // Predicated region
    $region26: #{tpu_custom_call.1} parent=1 // pred_check
      _
    $region27: #{tpu_custom_call.1} parent=1 // pred_check_branch
      %370 = sbr.rel (0) target = $region29
    $region28: #{tpu_custom_call.1} parent=1 // pred_region
      %s372 = ssub.s32 128, 128
      %373 = vsyncadd [#allocation4], %s372
      %s375 = sshll.u32 [#allocation7], 4
      %s376 = int_to_ptr.vmem [resolvable:$true] %s375
      %378 = dma.vmem_to_hbm [thread:$0]  %s376, 128, %s4, [#allocation4]
    $region29: #{tpu_custom_call.1} parent=1 // pred_fallthru
      _
    // Predicated region
    $region30: #{tpu_custom_call.1} parent=1 // pred_check
      _
    $region31: #{tpu_custom_call.1} parent=1 // pred_check_branch
      %380 = sbr.rel (0) target = $region33
    $region32: #{tpu_custom_call.1} parent=1 // pred_region
      %381 = dma.done [#allocation4], 128
    $region33: #{tpu_custom_call.1} parent=1 // pred_fallthru
      _
    %382 = vsyncpa [#allocation3], 1
    %383 = vsyncpa [#allocation6], 1
    %384 = vsyncpa [#allocation4], 1

</llo_original>
